<compile_context>
chip_gen: v7x
topology: tpu7x:2x2x1
jax: 0.10.0
libtpu: 0.0.40
codegen_flags: <defaults>
</compile_context>

<pallas_src>
import functools

import jax
import jax.numpy as jnp
from jax.experimental import pallas as pl
from jax.experimental.pallas import tpu as pltpu

LANE = 128  # lane-dense padded width for the output head


# ----------------------------------------------------------------------------
# Pallas kernel: per decode step --
#   embedding gather -> ReLU -> fused GRU cell -> padded Linear head -> LogSoftmax
# Hidden state is carried across grid steps in the resident hidden-output block.
# ----------------------------------------------------------------------------
def decoder_kernel(tok_ref,                       # SMEM (T,) int32 (scalar prefetch)
                   h0_ref, emb_ref,
                   w_i_ref, w_h_ref, b_i_ref, b_hn_ref,
                   w_out_ref, b_out_ref,
                   logp_ref, h_out_ref):
    H = h0_ref.shape[-1]
    t = pl.program_id(0)

    # Initialize the carry (hidden output block is resident across the grid).
    @pl.when(t == 0)
    def _():
        h_out_ref[...] = h0_ref[...]

    h = h_out_ref[...]                                            # (1, H)

    # embedding(input).view(1,1,-1) + F.relu, done in-kernel
    tok = tok_ref[t]
    x = jnp.maximum(emb_ref[pl.ds(tok, 1), :], 0.0)               # (1, H)

    # Fused GRU gates (PyTorch convention), 2 matmuls instead of 6:
    #   gi = x @ [W_ir|W_iz|W_in] + (b_ir+b_hr | b_iz+b_hz | b_in)
    #   gh = h @ [W_hr|W_hz|W_hn]
    gi = jnp.dot(x, w_i_ref[...], preferred_element_type=jnp.float32) + b_i_ref[...]
    gh = jnp.dot(h, w_h_ref[...], preferred_element_type=jnp.float32)

    r = jax.nn.sigmoid(gi[:, :H] + gh[:, :H])
    z = jax.nn.sigmoid(gi[:, H:2 * H] + gh[:, H:2 * H])
    n = jnp.tanh(gi[:, 2 * H:] + r * (gh[:, 2 * H:] + b_hn_ref[...]))
    h_new = (1.0 - z) * n + z * h                                 # (1, H)
    h_out_ref[...] = h_new

    # Lane-padded Linear head + LogSoftmax (padded cols: weight=0, bias=-1e30 -> exp()=0)
    logits = jnp.dot(h_new, w_out_ref[...],
                     preferred_element_type=jnp.float32) + b_out_ref[...]   # (1, 128)
    m = jnp.max(logits, axis=-1, keepdims=True)
    lse = jnp.log(jnp.sum(jnp.exp(logits - m), axis=-1, keepdims=True)) + m
    logp_ref[...] = (logits - lse).reshape(logp_ref.shape)


# ----------------------------------------------------------------------------
# Wrapper: one pallas_call for a whole token sequence (T >= 1).
# Weights stay resident in VMEM across all steps (constant index_maps).
# ----------------------------------------------------------------------------
@functools.partial(jax.jit, static_argnames=("out_size",))
def decoder_decode(tokens, hidden, embedding,
                   w_i, w_h, b_i, b_hn, w_out_pad, b_out_pad, *, out_size):
    T = tokens.shape[0]
    H = hidden.shape[-1]
    V = embedding.shape[0]
    h0 = hidden.reshape(1, H)

    grid_spec = pltpu.PrefetchScalarGridSpec(
        num_scalar_prefetch=1,
        grid=(T,),
        in_specs=[
            pl.BlockSpec((1, H), lambda t, tok: (0, 0)),           # h0
            pl.BlockSpec((V, H), lambda t, tok: (0, 0)),           # embedding table
            pl.BlockSpec((H, 3 * H), lambda t, tok: (0, 0)),       # fused W_i
            pl.BlockSpec((H, 3 * H), lambda t, tok: (0, 0)),       # fused W_h
            pl.BlockSpec((1, 3 * H), lambda t, tok: (0, 0)),       # fused input bias
            pl.BlockSpec((1, H), lambda t, tok: (0, 0)),           # b_hn
            pl.BlockSpec((H, LANE), lambda t, tok: (0, 0)),        # padded head weight
            pl.BlockSpec((1, LANE), lambda t, tok: (0, 0)),        # padded head bias
        ],
        out_specs=(
            pl.BlockSpec((1, 1, LANE), lambda t, tok: (t, 0, 0)),  # per-step log-probs
            pl.BlockSpec((1, H), lambda t, tok: (0, 0)),           # final hidden (carry)
        ),
    )

    logp_pad, h_fin = pl.pallas_call(
        decoder_kernel,
        out_shape=(
            jax.ShapeDtypeStruct((T, 1, LANE), jnp.float32),
            jax.ShapeDtypeStruct((1, H), jnp.float32),
        ),
        grid_spec=grid_spec,
        compiler_params=pltpu.CompilerParams(dimension_semantics=("arbitrary",)),
    )(tokens, h0, embedding, w_i, w_h, b_i, b_hn, w_out_pad, b_out_pad)

    logp = logp_pad.reshape(T, LANE)[:, :out_size]
    return logp, h_fin.reshape(1, 1, H)


def decoder_forward(token, hidden, i, embedding, fused_gru, padded_heads, output_sizes):
    """Matches DecoderRNN.forward(input, hidden, i): single step, static head index."""
    tokens = jnp.reshape(token, (1,)).astype(jnp.int32)
    w_i, w_h, b_i, b_hn = fused_gru
    w_out_pad, b_out_pad = padded_heads[i]
    return decoder_decode(tokens, hidden, embedding, w_i, w_h, b_i, b_hn,
                          w_out_pad, b_out_pad, out_size=output_sizes[i])


# ----------------------------------------------------------------------------
# Parameter construction & fusion (deterministic, synthetic — no checkpoint)
# ----------------------------------------------------------------------------
def make_params(key, vocab, hidden_size, output_sizes):
    keys = jax.random.split(key, 16 + 2 * len(output_sizes))
    k = iter(keys)
    bound = 1.0 / jnp.sqrt(hidden_size)

    def u(key_, shape):
        return jax.random.uniform(key_, shape, jnp.float32, -bound, bound)

    embedding = jax.random.normal(next(k), (vocab, hidden_size), jnp.float32)

    # GRU weights pre-transposed (H_in, H_out); biases (1, H)
    gru = tuple(u(next(k), (hidden_size, hidden_size)) for _ in range(6)) + \
          tuple(u(next(k), (1, hidden_size)) for _ in range(6))

    heads = []
    for o in output_sizes:
        heads.append((u(next(k), (hidden_size, o)), u(next(k), (1, o))))
    return embedding, gru, heads


def fuse_gru(gru_params):
    (w_ir, w_iz, w_in, w_hr, w_hz, w_hn,
     b_ir, b_iz, b_in, b_hr, b_hz, b_hn) = gru_params
    w_i = jnp.concatenate([w_ir, w_iz, w_in], axis=1)              # (H, 3H)
    w_h = jnp.concatenate([w_hr, w_hz, w_hn], axis=1)              # (H, 3H)
    b_i = jnp.concatenate([b_ir + b_hr, b_iz + b_hz, b_in], axis=1)  # (1, 3H)
    return w_i, w_h, b_i, b_hn


def pad_head(w_out_t, b_out, lane=LANE):
    H, O = w_out_t.shape
    w_pad = jnp.zeros((H, lane), jnp.float32).at[:, :O].set(w_out_t)
    b_pad = jnp.full((1, lane), -1e30, jnp.float32).at[:, :O].set(b_out)
    return w_pad, b_pad


# ----------------------------------------------------------------------------
# Pure-JAX reference (mirrors PyTorch math) for correctness checks
# ----------------------------------------------------------------------------
def reference_step(x_emb, hidden, gru_params, w_out_t, b_out):
    (w_ir, w_iz, w_in, w_hr, w_hz, w_hn,
     b_ir, b_iz, b_in, b_hr, b_hz, b_hn) = gru_params
    x = jnp.maximum(x_emb, 0.0)
    h = hidden.reshape(1, -1)
    r = jax.nn.sigmoid(x @ w_ir + b_ir + h @ w_hr + b_hr)
    z = jax.nn.sigmoid(x @ w_iz + b_iz + h @ w_hz + b_hz)
    n = jnp.tanh(x @ w_in + b_in + r * (h @ w_hn + b_hn))
    h_new = (1.0 - z) * n + z * h
    logits = h_new @ w_out_t + b_out
    logp = jax.nn.log_softmax(logits, axis=1)
    return logp, h_new.reshape(1, 1, -1)


if __name__ == "__main__":
    H = 32
    VOCAB = 50
    OUTPUT_SIZES = (8, 16, 24, 32, 40)   # output_size_1 .. output_size_5
    HEAD_I = 2                           # static `i` selecting self.outs[i]

    key = jax.random.PRNGKey(0)
    embedding, gru_params, heads = make_params(key, VOCAB, H, OUTPUT_SIZES)
    fused_gru = fuse_gru(gru_params)
    padded_heads = [pad_head(w, b) for (w, b) in heads]
    w_out_t, b_out = heads[HEAD_I]

    # ---- single step: matches DecoderRNN.forward(input, hidden, i) ----
    token = jnp.array(7, dtype=jnp.int32)
    hidden = jnp.zeros((1, 1, H), dtype=jnp.float32)   # initHidden()

    logp, new_hidden = decoder_forward(token, hidden, HEAD_I,
                                       embedding, fused_gru, padded_heads, OUTPUT_SIZES)
    logp = jax.block_until_ready(logp)
    new_hidden = jax.block_until_ready(new_hidden)

    x_emb = embedding[token].reshape(1, H)
    logp_ref, hidden_ref = reference_step(x_emb, hidden, gru_params, w_out_t, b_out)
    assert logp.shape == (1, OUTPUT_SIZES[HEAD_I])
    assert new_hidden.shape == (1, 1, H)
    assert jnp.allclose(logp, logp_ref, atol=1e-4), "log-softmax output mismatch"
    assert jnp.allclose(new_hidden, hidden_ref, atol=1e-4), "hidden state mismatch"

    # ---- fused multi-step decode: whole loop inside one pallas_call ----
    tokens = jnp.array([7, 3, 19, 42], dtype=jnp.int32)
    w_i, w_h, b_i, b_hn = fused_gru
    w_out_pad, b_out_pad = padded_heads[HEAD_I]
    logp_seq, h_fin = decoder_decode(tokens, hidden, embedding,
                                     w_i, w_h, b_i, b_hn, w_out_pad, b_out_pad,
                                     out_size=OUTPUT_SIZES[HEAD_I])
    logp_seq = jax.block_until_ready(logp_seq)
    h_fin = jax.block_until_ready(h_fin)

    h_ref = hidden
    for t in range(tokens.shape[0]):
        x_t = embedding[tokens[t]].reshape(1, H)
        lp_ref, h_ref = reference_step(x_t, h_ref, gru_params, w_out_t, b_out)
        assert jnp.allclose(logp_seq[t:t + 1], lp_ref, atol=1e-4), f"step {t} logp mismatch"
    assert jnp.allclose(h_fin, h_ref, atol=1e-4), "final hidden mismatch"

    print("KERNEL_OK")
</pallas_src>

<mosaic_0001>
module attributes {stable_mosaic.version = 11 : i64} {
  func.func @decoder_kernel(%arg0: i32, %arg1: memref<1xi32, #tpu.memory_space<smem>>, %arg2: memref<1x32xf32, #tpu.memory_space<vmem>>, %arg3: memref<50x32xf32, #tpu.memory_space<vmem>>, %arg4: memref<32x96xf32, #tpu.memory_space<vmem>>, %arg5: memref<32x96xf32, #tpu.memory_space<vmem>>, %arg6: memref<1x96xf32, #tpu.memory_space<vmem>>, %arg7: memref<1x32xf32, #tpu.memory_space<vmem>>, %arg8: memref<32x128xf32, #tpu.memory_space<vmem>>, %arg9: memref<1x128xf32, #tpu.memory_space<vmem>>, %arg10: memref<1x1x128xf32, #tpu.memory_space<vmem>>, %arg11: memref<1x32xf32, #tpu.memory_space<vmem>>) attributes {dimension_semantics = [#tpu.dimension_semantics<arbitrary>], iteration_bounds = array<i64: 1>, scalar_prefetch = 1 : i64, scratch_operands = 0 : i64, tpu.core_type = #tpu.core_type<tc>, window_params = [{pipeline_mode = #tpu.pipeline_mode<synchronous>, transform_indices = @transform_0, window_bounds = array<i64: 1, 32>}, {pipeline_mode = #tpu.pipeline_mode<synchronous>, transform_indices = @transform_1, window_bounds = array<i64: 50, 32>}, {pipeline_mode = #tpu.pipeline_mode<synchronous>, transform_indices = @transform_2, window_bounds = array<i64: 32, 96>}, {pipeline_mode = #tpu.pipeline_mode<synchronous>, transform_indices = @transform_3, window_bounds = array<i64: 32, 96>}, {pipeline_mode = #tpu.pipeline_mode<synchronous>, transform_indices = @transform_4, window_bounds = array<i64: 1, 96>}, {pipeline_mode = #tpu.pipeline_mode<synchronous>, transform_indices = @transform_5, window_bounds = array<i64: 1, 32>}, {pipeline_mode = #tpu.pipeline_mode<synchronous>, transform_indices = @transform_6, window_bounds = array<i64: 32, 128>}, {pipeline_mode = #tpu.pipeline_mode<synchronous>, transform_indices = @transform_7, window_bounds = array<i64: 1, 128>}, {transform_indices = @transform_8, window_bounds = array<i64: 1, 1, 128>}, {pipeline_mode = #tpu.pipeline_mode<synchronous>, transform_indices = @transform_9, window_bounds = array<i64: 1, 32>}]} {
    %c0_i32 = arith.constant 0 : i32
    %0 = arith.cmpi eq, %arg0, %c0_i32 : i32
    %1 = arith.extui %0 : i1 to i32
    %c0_i32_0 = arith.constant 0 : i32
    %2 = arith.cmpi ne, %1, %c0_i32_0 : i32
    scf.if %2 {
      %c0_28 = arith.constant 0 : index
      %c0_29 = arith.constant 0 : index
      %62 = vector.load %arg2[%c0_28, %c0_29] : memref<1x32xf32, #tpu.memory_space<vmem>>, vector<1x32xf32>
      %c0_30 = arith.constant 0 : index
      %c0_31 = arith.constant 0 : index
      %63 = vector.load %arg11[%c0_30, %c0_31] : memref<1x32xf32, #tpu.memory_space<vmem>>, vector<1x32xf32>
      tpu.vector_store %arg11[%c0_30, %c0_31], %62 {strides = array<i32>} : memref<1x32xf32, #tpu.memory_space<vmem>>, vector<1x32xf32>,
    } else {
    }
    %c0 = arith.constant 0 : index
    %c0_1 = arith.constant 0 : index
    %3 = vector.load %arg11[%c0, %c0_1] : memref<1x32xf32, #tpu.memory_space<vmem>>, vector<1x32xf32>
    %4 = arith.index_cast %arg0 : i32 to index
    %5 = memref.load %arg1[%4] : memref<1xi32, #tpu.memory_space<smem>>
    %6 = arith.index_cast %5 : i32 to index
    %c0_2 = arith.constant 0 : index
    %7 = vector.load %arg3[%6, %c0_2] : memref<50x32xf32, #tpu.memory_space<vmem>>, vector<1x32xf32>
    %cst = arith.constant 0.000000e+00 : f32
    %8 = vector.broadcast %cst : f32 to vector<1x32xf32>
    %9 = arith.maximumf %7, %8 : vector<1x32xf32>
    %c0_3 = arith.constant 0 : index
    %c0_4 = arith.constant 0 : index
    %10 = vector.load %arg4[%c0_3, %c0_4] : memref<32x96xf32, #tpu.memory_space<vmem>>, vector<32x96xf32>
    %cst_5 = arith.constant dense<0.000000e+00> : vector<1x96xf32>
    %11 = tpu.matmul %9, %10, %cst_5 {dimension_numbers = #tpu.dot_dimension_numbers<[1], [0], [0], [1], [0, 0, 1, 1], [], []>} : vector<1x32xf32>, vector<32x96xf32>, vector<1x96xf32> -> vector<1x96xf32>
    %c0_6 = arith.constant 0 : index
    %c0_7 = arith.constant 0 : index
    %12 = vector.load %arg6[%c0_6, %c0_7] : memref<1x96xf32, #tpu.memory_space<vmem>>, vector<1x96xf32>
    %13 = arith.addf %11, %12 : vector<1x96xf32>
    %c0_8 = arith.constant 0 : index
    %c0_9 = arith.constant 0 : index
    %14 = vector.load %arg5[%c0_8, %c0_9] : memref<32x96xf32, #tpu.memory_space<vmem>>, vector<32x96xf32>
    %cst_10 = arith.constant dense<0.000000e+00> : vector<1x96xf32>
    %15 = tpu.matmul %3, %14, %cst_10 {dimension_numbers = #tpu.dot_dimension_numbers<[1], [0], [0], [1], [0, 0, 1, 1], [], []>} : vector<1x32xf32>, vector<32x96xf32>, vector<1x96xf32> -> vector<1x96xf32>
    %16 = vector.extract_strided_slice %13 {offsets = [0, 0], sizes = [1, 32], strides = [1, 1]} : vector<1x96xf32> to vector<1x32xf32>
    %17 = vector.extract_strided_slice %15 {offsets = [0, 0], sizes = [1, 32], strides = [1, 1]} : vector<1x96xf32> to vector<1x32xf32>
    %18 = arith.addf %16, %17 : vector<1x32xf32>
    %19 = arith.negf %18 : vector<1x32xf32>
    %20 = math.exp %19 : vector<1x32xf32>
    %cst_11 = arith.constant 1.000000e+00 : f32
    %21 = vector.broadcast %cst_11 : f32 to vector<1x32xf32>
    %22 = arith.addf %21, %20 : vector<1x32xf32>
    %23 = arith.divf %21, %22 : vector<1x32xf32>
    %24 = vector.extract_strided_slice %13 {offsets = [0, 32], sizes = [1, 32], strides = [1, 1]} : vector<1x96xf32> to vector<1x32xf32>
    %25 = vector.extract_strided_slice %15 {offsets = [0, 32], sizes = [1, 32], strides = [1, 1]} : vector<1x96xf32> to vector<1x32xf32>
    %26 = arith.addf %24, %25 : vector<1x32xf32>
    %27 = arith.negf %26 : vector<1x32xf32>
    %28 = math.exp %27 : vector<1x32xf32>
    %cst_12 = arith.constant 1.000000e+00 : f32
    %29 = vector.broadcast %cst_12 : f32 to vector<1x32xf32>
    %30 = arith.addf %29, %28 : vector<1x32xf32>
    %31 = arith.divf %29, %30 : vector<1x32xf32>
    %32 = vector.extract_strided_slice %13 {offsets = [0, 64], sizes = [1, 32], strides = [1, 1]} : vector<1x96xf32> to vector<1x32xf32>
    %33 = vector.extract_strided_slice %15 {offsets = [0, 64], sizes = [1, 32], strides = [1, 1]} : vector<1x96xf32> to vector<1x32xf32>
    %c0_13 = arith.constant 0 : index
    %c0_14 = arith.constant 0 : index
    %34 = vector.load %arg7[%c0_13, %c0_14] : memref<1x32xf32, #tpu.memory_space<vmem>>, vector<1x32xf32>
    %35 = arith.addf %33, %34 : vector<1x32xf32>
    %36 = arith.mulf %23, %35 : vector<1x32xf32>
    %37 = arith.addf %32, %36 : vector<1x32xf32>
    %38 = math.tanh %37 : vector<1x32xf32>
    %cst_15 = arith.constant 1.000000e+00 : f32
    %39 = vector.broadcast %cst_15 : f32 to vector<1x32xf32>
    %40 = arith.subf %39, %31 : vector<1x32xf32>
    %41 = arith.mulf %40, %38 : vector<1x32xf32>
    %42 = arith.mulf %31, %3 : vector<1x32xf32>
    %43 = arith.addf %41, %42 : vector<1x32xf32>
    %c0_16 = arith.constant 0 : index
    %c0_17 = arith.constant 0 : index
    %44 = vector.load %arg11[%c0_16, %c0_17] : memref<1x32xf32, #tpu.memory_space<vmem>>, vector<1x32xf32>
    tpu.vector_store %arg11[%c0_16, %c0_17], %43 {strides = array<i32>} : memref<1x32xf32, #tpu.memory_space<vmem>>, vector<1x32xf32>,
    %c0_18 = arith.constant 0 : index
    %c0_19 = arith.constant 0 : index
    %45 = vector.load %arg8[%c0_18, %c0_19] : memref<32x128xf32, #tpu.memory_space<vmem>>, vector<32x128xf32>
    %cst_20 = arith.constant dense<0.000000e+00> : vector<1x128xf32>
    %46 = tpu.matmul %43, %45, %cst_20 {dimension_numbers = #tpu.dot_dimension_numbers<[1], [0], [0], [1], [0, 0, 1, 1], [], []>} : vector<1x32xf32>, vector<32x128xf32>, vector<1x128xf32> -> vector<1x128xf32>
    %c0_21 = arith.constant 0 : index
    %c0_22 = arith.constant 0 : index
    %47 = vector.load %arg9[%c0_21, %c0_22] : memref<1x128xf32, #tpu.memory_space<vmem>>, vector<1x128xf32>
    %48 = arith.addf %46, %47 : vector<1x128xf32>
    %cst_23 = arith.constant dense<0xFF800000> : vector<1xf32>
    %49 = vector.multi_reduction <maximumf>, %48, %cst_23 [1] : vector<1x128xf32> to vector<1xf32>
    %50 = vector.shape_cast %49 : vector<1xf32> to vector<1x1xf32>
    %51 = vector.broadcast %50 : vector<1x1xf32> to vector<1x128xf32>
    %52 = arith.subf %48, %51 : vector<1x128xf32>
    %53 = math.exp %52 : vector<1x128xf32>
    %cst_24 = arith.constant dense<0.000000e+00> : vector<1xf32>
    %54 = vector.multi_reduction <add>, %53, %cst_24 [1] : vector<1x128xf32> to vector<1xf32>
    %55 = vector.shape_cast %54 : vector<1xf32> to vector<1x1xf32>
    %56 = math.log %55 : vector<1x1xf32>
    %57 = arith.addf %56, %50 : vector<1x1xf32>
    %58 = vector.broadcast %57 : vector<1x1xf32> to vector<1x128xf32>
    %59 = arith.subf %48, %58 : vector<1x128xf32>
    %60 = vector.shape_cast %59 : vector<1x128xf32> to vector<1x1x128xf32>
    %c0_25 = arith.constant 0 : index
    %c0_26 = arith.constant 0 : index
    %c0_27 = arith.constant 0 : index
    %61 = vector.load %arg10[%c0_25, %c0_26, %c0_27] : memref<1x1x128xf32, #tpu.memory_space<vmem>>, vector<1x1x128xf32>
    tpu.vector_store %arg10[%c0_25, %c0_26, %c0_27], %60 {strides = array<i32>} : memref<1x1x128xf32, #tpu.memory_space<vmem>>, vector<1x1x128xf32>,
    return
  }
  func.func @transform_0(%arg0: i32, %arg1: memref<1xi32, #tpu.memory_space<smem>>) -> (i32, i32) {
    %c0_i32 = arith.constant 0 : i32
    %c0_i32_0 = arith.constant 0 : i32
    %c0_i32_1 = arith.constant 0 : i32
    return %c0_i32, %c0_i32_0 : i32, i32
  }
  func.func @transform_1(%arg0: i32, %arg1: memref<1xi32, #tpu.memory_space<smem>>) -> (i32, i32) {
    %c0_i32 = arith.constant 0 : i32
    %c0_i32_0 = arith.constant 0 : i32
    %c0_i32_1 = arith.constant 0 : i32
    return %c0_i32, %c0_i32_0 : i32, i32
  }
  func.func @transform_2(%arg0: i32, %arg1: memref<1xi32, #tpu.memory_space<smem>>) -> (i32, i32) {
    %c0_i32 = arith.constant 0 : i32
    %c0_i32_0 = arith.constant 0 : i32
    %c0_i32_1 = arith.constant 0 : i32
    return %c0_i32, %c0_i32_0 : i32, i32
  }
  func.func @transform_3(%arg0: i32, %arg1: memref<1xi32, #tpu.memory_space<smem>>) -> (i32, i32) {
    %c0_i32 = arith.constant 0 : i32
    %c0_i32_0 = arith.constant 0 : i32
    %c0_i32_1 = arith.constant 0 : i32
    return %c0_i32, %c0_i32_0 : i32, i32
  }
  func.func @transform_4(%arg0: i32, %arg1: memref<1xi32, #tpu.memory_space<smem>>) -> (i32, i32) {
    %c0_i32 = arith.constant 0 : i32
    %c0_i32_0 = arith.constant 0 : i32
    %c0_i32_1 = arith.constant 0 : i32
    return %c0_i32, %c0_i32_0 : i32, i32
  }
  func.func @transform_5(%arg0: i32, %arg1: memref<1xi32, #tpu.memory_space<smem>>) -> (i32, i32) {
    %c0_i32 = arith.constant 0 : i32
    %c0_i32_0 = arith.constant 0 : i32
    %c0_i32_1 = arith.constant 0 : i32
    return %c0_i32, %c0_i32_0 : i32, i32
  }
  func.func @transform_6(%arg0: i32, %arg1: memref<1xi32, #tpu.memory_space<smem>>) -> (i32, i32) {
    %c0_i32 = arith.constant 0 : i32
    %c0_i32_0 = arith.constant 0 : i32
    %c0_i32_1 = arith.constant 0 : i32
    return %c0_i32, %c0_i32_0 : i32, i32
  }
  func.func @transform_7(%arg0: i32, %arg1: memref<1xi32, #tpu.memory_space<smem>>) -> (i32, i32) {
    %c0_i32 = arith.constant 0 : i32
    %c0_i32_0 = arith.constant 0 : i32
    %c0_i32_1 = arith.constant 0 : i32
    return %c0_i32, %c0_i32_0 : i32, i32
  }
  func.func @transform_8(%arg0: i32, %arg1: memref<1xi32, #tpu.memory_space<smem>>) -> (i32, i32, i32) {
    %c0_i32 = arith.constant 0 : i32
    %c0_i32_0 = arith.constant 0 : i32
    %c0_i32_1 = arith.constant 0 : i32
    return %arg0, %c0_i32, %c0_i32_0 : i32, i32, i32
  }
  func.func @transform_9(%arg0: i32, %arg1: memref<1xi32, #tpu.memory_space<smem>>) -> (i32, i32) {
    %c0_i32 = arith.constant 0 : i32
    %c0_i32_0 = arith.constant 0 : i32
    %c0_i32_1 = arith.constant 0 : i32
    return %c0_i32, %c0_i32_0 : i32, i32
  }
}

</mosaic_0001>

<llo_original>
// kernel: decoder_decode.1
$region0: #{decoder_decode.1}
  #allocation0 [shape = 'u32[]', space=smem, size = 0x4, offset = 0x4, fixed_abs, tag = 'smem constant byte address 0x4 - core index']
  #allocation1 [shape = 'u32[144,128]{1,0:T(1,128)}', space=vmem, size = 0x12000, scoped, tag = 'internal scratch']
  #allocation2 [shape = 's32[1]{0}', space=sflag, size = 0x4, scoped, tag = 'scoped memory for decoder_decode.1']
  #allocation3 [shape = 's32[1]{0:T(128)S(6)}', space=smem, size = 0x200, scoped, tag = 'prefetched SMEM operand 0']
  %s0 = inlined_call_operand.<no memory space> [shape: s32[1], index: 0, kind: input, shape index: {}]
  %s1 = inlined_call_operand.vmem [shape: f32[1,32], index: 1, kind: input, shape index: {}]
  %s2 = inlined_call_operand.vmem [shape: f32[50,32], index: 2, kind: input, shape index: {}]
  %s3 = inlined_call_operand.vmem [shape: f32[32,96], index: 3, kind: input, shape index: {}]
  %s4 = inlined_call_operand.vmem [shape: f32[32,96], index: 4, kind: input, shape index: {}]
  %s5 = inlined_call_operand.vmem [shape: f32[1,96], index: 5, kind: input, shape index: {}]
  %s6 = inlined_call_operand.vmem [shape: f32[1,32], index: 6, kind: input, shape index: {}]
  %s7 = inlined_call_operand.vmem [shape: f32[32,128], index: 7, kind: input, shape index: {}]
  %s8 = inlined_call_operand.vmem [shape: f32[1,128], index: 8, kind: input, shape index: {}]
  %s9 = inlined_call_operand.hbm [shape: f32[1,1,128], index: 9, kind: output, shape index: {0}]
  %s10 = inlined_call_operand.hbm [shape: f32[1,32], index: 10, kind: output, shape index: {1}]
  %11 = xla_tuple %s9, %s10
  %s12 = sld [smem:[#allocation0]]
  $region54: #{decoder_decode.1} parent=0
    _
  %s14 = ssub.s32 1, %s12
  %s15 = scalar_select 0, %s14, %s12
  %16 = sst [smem:[#allocation3]] %s0
  $region1: #{decoder_decode.1} parent=0
    #allocation4 [shape = 'u8[512]{0}', space=vmem, size = 0x400, scoped, tag = 'output window, operand 0, single buffered']
    #allocation5 [shape = 's32[1]{0}', space=sflag, size = 0x4, scoped, tag = 'scoped memory for decoder_decode.1']
    #allocation6 [shape = 'u8[512]{0}', space=vmem, size = 0x400, scoped, tag = 'output window, operand 1, single buffered']
    #allocation7 [shape = 's32[1]{0}', space=sflag, size = 0x4, scoped, tag = 'scoped memory for decoder_decode.1']
    %17 = vsyncpa [#allocation5], 0
    %18 = vsyncpa [#allocation7], 0
    // Predicated region
    $region2: #{decoder_decode.1} parent=1 // pred_check
      _
    $region3: #{decoder_decode.1} parent=1 // pred_check_branch
      %20 = sbr.rel (0) target = $region5
    $region4: #{decoder_decode.1} parent=1 // pred_region
      _
    $region5: #{decoder_decode.1} parent=1 // pred_fallthru
      _
    // Predicated region
    $region6: #{decoder_decode.1} parent=1 // pred_check
      _
    $region7: #{decoder_decode.1} parent=1 // pred_check_branch
      %22 = sbr.rel (0) target = $region9
    $region8: #{decoder_decode.1} parent=1 // pred_region
      _
    $region9: #{decoder_decode.1} parent=1 // pred_fallthru
      _
    // Predicated region
    $region10: #{decoder_decode.1} parent=1 // pred_check
      _
    $region11: #{decoder_decode.1} parent=1 // pred_check_branch
      %24 = sbr.rel (0) target = $region13
    $region12: #{decoder_decode.1} parent=1 // pred_region
      _
    $region13: #{decoder_decode.1} parent=1 // pred_fallthru
      _
    // Predicated region
    $region14: #{decoder_decode.1} parent=1 // pred_check
      _
    $region15: #{decoder_decode.1} parent=1 // pred_check_branch
      %26 = sbr.rel (0) target = $region17
    $region16: #{decoder_decode.1} parent=1 // pred_region
      _
    $region17: #{decoder_decode.1} parent=1 // pred_fallthru
      _
    // Predicated region
    $region18: #{decoder_decode.1} parent=1 // pred_check
      _
    $region19: #{decoder_decode.1} parent=1 // pred_check_branch
      %28 = sbr.rel (0) target = $region21
    $region20: #{decoder_decode.1} parent=1 // pred_region
      _
    $region21: #{decoder_decode.1} parent=1 // pred_fallthru
      _
    // Predicated region
    $region22: #{decoder_decode.1} parent=1 // pred_check
      _
    $region23: #{decoder_decode.1} parent=1 // pred_check_branch
      %30 = sbr.rel (0) target = $region25
    $region24: #{decoder_decode.1} parent=1 // pred_region
      _
    $region25: #{decoder_decode.1} parent=1 // pred_fallthru
      _
    // Predicated region
    $region26: #{decoder_decode.1} parent=1 // pred_check
      _
    $region27: #{decoder_decode.1} parent=1 // pred_check_branch
      %32 = sbr.rel (0) target = $region29
    $region28: #{decoder_decode.1} parent=1 // pred_region
      _
    $region29: #{decoder_decode.1} parent=1 // pred_fallthru
      _
    // Predicated region
    $region30: #{decoder_decode.1} parent=1 // pred_check
      _
    $region31: #{decoder_decode.1} parent=1 // pred_check_branch
      %34 = sbr.rel (0) target = $region33
    $region32: #{decoder_decode.1} parent=1 // pred_region
      _
    $region33: #{decoder_decode.1} parent=1 // pred_fallthru
      _
    %p35 = scmp.eq.s32.totalorder 0, 0
    // Predicated region
    $region34: #{decoder_decode.1} parent=1 // pred_check
      %p36 = pneg %p35
    $region35: #{decoder_decode.1} parent=1 // pred_check_branch
      %38 = sbr.rel (%p36) target = $region37
    $region36: #{decoder_decode.1} parent=1 // pred_region
      %v39 = vld [vmem:[%s1] sm:$0x1]
      %vm40 = vcmask 253952
      %41 = vst.msk [vmem:[#allocation6] sm:$0x1] %vm40, %v39
    $region37: #{decoder_decode.1} parent=1 // pred_fallthru
      _
    %v42 = vld [vmem:[#allocation6] sm:$0x1]
    %s43 = sld [smem:[#allocation3]]
    %s44 = scalar_lea.vmem %s2, %s43
    %v45 = vld [vmem:[%s44] sm:$0x1]
    %v46 = vmax.f32 %v45, 0.0
    %v47 = vld [vmem:[%s3] sm:$0xff]
    %v48 = vld [vmem:[%s3 + $0x8] sm:$0xff]
    %v49 = vld [vmem:[%s3 + $0x10] sm:$0xff]
    %v50 = vld [vmem:[%s3 + $0x18] sm:$0xff]
    %v51 = vld [vmem:[%s5] sm:$0x1]
    %vm52 = vcmask 261120
    %v54 = vsel %vm52, %v46, 0
    %56 = vmatprep.subr.mxu0 0.0
    %57 = vmatpush1.msra.mxu0 %v47
    %58 = vmatprep.subr.mxu0 0.0
    %59 = vmatpush1.msra.mxu0 %v48
    %60 = vmatprep.subr.mxu0 0.0
    %61 = vmatpush1.msra.mxu0 %v49
    %62 = vmatprep.subr.mxu0 0.0
    %63 = vmatpush1.msra.mxu0 %v50
    %64 = vmatprep.subr.mxu0 0.0
    %65 = vmatpush1.msra.mxu0 0.0
    %66 = vmatprep.subr.mxu0 0.0
    %67 = vmatpush1.msra.mxu0 0.0
    %68 = vmatprep.subr.mxu0 0.0
    %69 = vmatpush1.msra.mxu0 0.0
    %70 = vmatprep.subr.mxu0 0.0
    %71 = vmatpush1.msra.mxu0 0.0
    %72 = vmatprep.subr.mxu0 0.0
    %73 = vmatpush1.msra.mxu0 0.0
    %74 = vmatprep.subr.mxu0 0.0
    %75 = vmatpush1.msra.mxu0 0.0
    %76 = vmatprep.subr.mxu0 0.0
    %77 = vmatpush1.msra.mxu0 0.0
    %78 = vmatprep.subr.mxu0 0.0
    %79 = vmatpush1.msra.mxu0 0.0
    %80 = vmatprep.subr.mxu0 0.0
    %81 = vmatpush1.msra.mxu0 0.0
    %82 = vmatprep.subr.mxu0 0.0
    %83 = vmatpush1.msra.mxu0 0.0
    %84 = vmatprep.subr.mxu0 0.0
    %85 = vmatpush1.msra.mxu0 0.0
    %86 = vmatprep.subr.mxu0 0.0
    %87 = vmatpush1.msra.mxu0 0.0
    %88 = vmatprep.subr.mxu0 0.0
    %89 = vmatpush1.msra.mxu0 0.0
    %90 = vmatprep.subr.mxu0 0.0
    %91 = vmatpush1.msra.mxu0 0.0
    %92 = vmatprep.subr.mxu0 0.0
    %93 = vmatpush1.msra.mxu0 0.0
    %94 = vmatprep.subr.mxu0 0.0
    %95 = vmatpush1.msra.mxu0 0.0
    %96 = vmatprep.subr.mxu0 0.0
    %97 = vmatpush1.msra.mxu0 0.0
    %98 = vmatprep.subr.mxu0 0.0
    %99 = vmatpush1.msra.mxu0 0.0
    %100 = vmatprep.subr.mxu0 0.0
    %101 = vmatpush1.msra.mxu0 0.0
    %102 = vmatprep.subr.mxu0 0.0
    %103 = vmatpush1.msra.mxu0 0.0
    %104 = vmatprep.subr.mxu0 0.0
    %105 = vmatpush1.msra.mxu0 0.0
    %106 = vmatprep.subr.mxu0 0.0
    %107 = vmatpush1.msra.mxu0 0.0
    %108 = vmatprep.subr.mxu0 0.0
    %109 = vmatpush1.msra.mxu0 0.0
    %110 = vmatprep.subr.mxu0 0.0
    %111 = vmatpush1.msra.mxu0 0.0
    %112 = vmatprep.subr.mxu0 0.0
    %113 = vmatpush1.msra.mxu0 0.0
    %114 = vmatprep.subr.mxu0 0.0
    %115 = vmatpush1.msra.mxu0 0.0
    %116 = vmatprep.subr.mxu0 0.0
    %117 = vmatpush1.msra.mxu0 0.0
    %118 = vmatprep.subr.mxu0 0.0
    %119 = vmatpush1.msra.mxu0 0.0
    %120 = vmatprep.mubr.f32.mxu0 0.0
    %121 = vmatmul.mubr.f32.gmra.mrb[0].mxu0 %v54
    %v122 = vpop.f32.mrb[0].mxu0
    %v123 = vadd.f32 %v51, %v122
    %v124 = vpop.f32.mrb[0].mxu0
    %125 = vdwg.mxu0
    %v126 = vld [vmem:[%s4] sm:$0xff]
    %v127 = vld [vmem:[%s4 + $0x8] sm:$0xff]
    %v128 = vld [vmem:[%s4 + $0x10] sm:$0xff]
    %v129 = vld [vmem:[%s4 + $0x18] sm:$0xff]
    %v131 = vsel %vm52, %v42, 0
    %133 = vmatprep.subr.mxu0 0.0
    %134 = vmatpush1.msra.mxu0 %v126
    %135 = vmatprep.subr.mxu0 0.0
    %136 = vmatpush1.msra.mxu0 %v127
    %137 = vmatprep.subr.mxu0 0.0
    %138 = vmatpush1.msra.mxu0 %v128
    %139 = vmatprep.subr.mxu0 0.0
    %140 = vmatpush1.msra.mxu0 %v129
    %141 = vmatprep.subr.mxu0 0.0
    %142 = vmatpush1.msra.mxu0 0.0
    %143 = vmatprep.subr.mxu0 0.0
    %144 = vmatpush1.msra.mxu0 0.0
    %145 = vmatprep.subr.mxu0 0.0
    %146 = vmatpush1.msra.mxu0 0.0
    %147 = vmatprep.subr.mxu0 0.0
    %148 = vmatpush1.msra.mxu0 0.0
    %149 = vmatprep.subr.mxu0 0.0
    %150 = vmatpush1.msra.mxu0 0.0
    %151 = vmatprep.subr.mxu0 0.0
    %152 = vmatpush1.msra.mxu0 0.0
    %153 = vmatprep.subr.mxu0 0.0
    %154 = vmatpush1.msra.mxu0 0.0
    %155 = vmatprep.subr.mxu0 0.0
    %156 = vmatpush1.msra.mxu0 0.0
    %157 = vmatprep.subr.mxu0 0.0
    %158 = vmatpush1.msra.mxu0 0.0
    %159 = vmatprep.subr.mxu0 0.0
    %160 = vmatpush1.msra.mxu0 0.0
    %161 = vmatprep.subr.mxu0 0.0
    %162 = vmatpush1.msra.mxu0 0.0
    %163 = vmatprep.subr.mxu0 0.0
    %164 = vmatpush1.msra.mxu0 0.0
    %165 = vmatprep.subr.mxu0 0.0
    %166 = vmatpush1.msra.mxu0 0.0
    %167 = vmatprep.subr.mxu0 0.0
    %168 = vmatpush1.msra.mxu0 0.0
    %169 = vmatprep.subr.mxu0 0.0
    %170 = vmatpush1.msra.mxu0 0.0
    %171 = vmatprep.subr.mxu0 0.0
    %172 = vmatpush1.msra.mxu0 0.0
    %173 = vmatprep.subr.mxu0 0.0
    %174 = vmatpush1.msra.mxu0 0.0
    %175 = vmatprep.subr.mxu0 0.0
    %176 = vmatpush1.msra.mxu0 0.0
    %177 = vmatprep.subr.mxu0 0.0
    %178 = vmatpush1.msra.mxu0 0.0
    %179 = vmatprep.subr.mxu0 0.0
    %180 = vmatpush1.msra.mxu0 0.0
    %181 = vmatprep.subr.mxu0 0.0
    %182 = vmatpush1.msra.mxu0 0.0
    %183 = vmatprep.subr.mxu0 0.0
    %184 = vmatpush1.msra.mxu0 0.0
    %185 = vmatprep.subr.mxu0 0.0
    %186 = vmatpush1.msra.mxu0 0.0
    %187 = vmatprep.subr.mxu0 0.0
    %188 = vmatpush1.msra.mxu0 0.0
    %189 = vmatprep.subr.mxu0 0.0
    %190 = vmatpush1.msra.mxu0 0.0
    %191 = vmatprep.subr.mxu0 0.0
    %192 = vmatpush1.msra.mxu0 0.0
    %193 = vmatprep.subr.mxu0 0.0
    %194 = vmatpush1.msra.mxu0 0.0
    %195 = vmatprep.subr.mxu0 0.0
    %196 = vmatpush1.msra.mxu0 0.0
    %197 = vmatprep.mubr.f32.mxu0 0.0
    %198 = vmatmul.mubr.f32.gmra.mrb[0].mxu0 %v131
    %v199 = vpop.f32.mrb[0].mxu0
    %v200 = vadd.f32 0.0, %v199
    %v201 = vpop.f32.mrb[0].mxu0
    %202 = vdwg.mxu0
    %v203 = vadd.f32 %v123, %v200
    %v204 = vxor.u32 %v203, 2147483648
    %v205 = vmul.f32 %v204, 1.442695
    %v206 = vpow.pop %v205
    %v207 = vadd.f32 %v206, 1.0
    %v208 = vrcp.pop %v207
    %v209 = vmul.f32 1.0, %v208
    %v210 = vld [vmem:[%s6] sm:$0x1]
    %v212 = vlaneseq
    %v213 = vshrl.u32 %v212, 7
    %v214 = vsub.s32 0, %v213
    %v215 = vrot.slane %v210, %v214
    %216 = vrot.lane.b32.xlu0 %v215, 64
    %v217 = vpop.permute.xlu0 %216
    %v219 = vadd.f32 %v200, %v217
    %221 = vrot.lane.b32.xlu0 %v219, 64
    %v222 = vpop.permute.xlu0 %221
    %v224 = vmul.f32 %v209, %v222
    %226 = vrot.lane.b32.xlu0 %v224, 64
    %v227 = vpop.permute.xlu0 %226
    %v229 = vadd.f32 %v123, %v227
    %v230 = vtanh.pop %v229
    %v231 = vsub.f32 1.0, %v209
    %233 = vrot.lane.b32.xlu0 %v230, 96
    %v234 = vpop.permute.xlu0 %233
    %v236 = vmul.f32 %v231, %v234
    %v237 = vlaneseq
    %v238 = vshrl.u32 %v237, 7
    %v239 = vsub.s32 0, %v238
    %v240 = vrot.slane %v42, %v239
    %241 = vrot.lane.b32.xlu0 %v240, 32
    %v242 = vpop.permute.xlu0 %241
    %v244 = vmul.f32 %v209, %v242
    %v245 = vadd.f32 %v236, %v244
    %247 = vrot.lane.b32.xlu0 %v245, 96
    %v248 = vpop.permute.xlu0 %247
    %vm250 = vcmask 253952
    %251 = vst.msk [vmem:[#allocation6] sm:$0x1] %vm250, %v248
    %v252 = vld [vmem:[%s7] sm:$0xff]
    %v253 = vld [vmem:[%s7 + $0x8] sm:$0xff]
    %v254 = vld [vmem:[%s7 + $0x10] sm:$0xff]
    %v255 = vld [vmem:[%s7 + $0x18] sm:$0xff]
    %v256 = vld [vmem:[%s8] sm:$0x1]
    %v257 = vsel %vm52, %v248, 0
    %259 = vmatprep.subr.mxu0 0.0
    %260 = vmatpush1.msra.mxu0 %v252
    %261 = vmatprep.subr.mxu0 0.0
    %262 = vmatpush1.msra.mxu0 %v253
    %263 = vmatprep.subr.mxu0 0.0
    %264 = vmatpush1.msra.mxu0 %v254
    %265 = vmatprep.subr.mxu0 0.0
    %266 = vmatpush1.msra.mxu0 %v255
    %267 = vmatprep.subr.mxu0 0.0
    %268 = vmatpush1.msra.mxu0 0.0
    %269 = vmatprep.subr.mxu0 0.0
    %270 = vmatpush1.msra.mxu0 0.0
    %271 = vmatprep.subr.mxu0 0.0
    %272 = vmatpush1.msra.mxu0 0.0
    %273 = vmatprep.subr.mxu0 0.0
    %274 = vmatpush1.msra.mxu0 0.0
    %275 = vmatprep.subr.mxu0 0.0
    %276 = vmatpush1.msra.mxu0 0.0
    %277 = vmatprep.subr.mxu0 0.0
    %278 = vmatpush1.msra.mxu0 0.0
    %279 = vmatprep.subr.mxu0 0.0
    %280 = vmatpush1.msra.mxu0 0.0
    %281 = vmatprep.subr.mxu0 0.0
    %282 = vmatpush1.msra.mxu0 0.0
    %283 = vmatprep.subr.mxu0 0.0
    %284 = vmatpush1.msra.mxu0 0.0
    %285 = vmatprep.subr.mxu0 0.0
    %286 = vmatpush1.msra.mxu0 0.0
    %287 = vmatprep.subr.mxu0 0.0
    %288 = vmatpush1.msra.mxu0 0.0
    %289 = vmatprep.subr.mxu0 0.0
    %290 = vmatpush1.msra.mxu0 0.0
    %291 = vmatprep.subr.mxu0 0.0
    %292 = vmatpush1.msra.mxu0 0.0
    %293 = vmatprep.subr.mxu0 0.0
    %294 = vmatpush1.msra.mxu0 0.0
    %295 = vmatprep.subr.mxu0 0.0
    %296 = vmatpush1.msra.mxu0 0.0
    %297 = vmatprep.subr.mxu0 0.0
    %298 = vmatpush1.msra.mxu0 0.0
    %299 = vmatprep.subr.mxu0 0.0
    %300 = vmatpush1.msra.mxu0 0.0
    %301 = vmatprep.subr.mxu0 0.0
    %302 = vmatpush1.msra.mxu0 0.0
    %303 = vmatprep.subr.mxu0 0.0
    %304 = vmatpush1.msra.mxu0 0.0
    %305 = vmatprep.subr.mxu0 0.0
    %306 = vmatpush1.msra.mxu0 0.0
    %307 = vmatprep.subr.mxu0 0.0
    %308 = vmatpush1.msra.mxu0 0.0
    %309 = vmatprep.subr.mxu0 0.0
    %310 = vmatpush1.msra.mxu0 0.0
    %311 = vmatprep.subr.mxu0 0.0
    %312 = vmatpush1.msra.mxu0 0.0
    %313 = vmatprep.subr.mxu0 0.0
    %314 = vmatpush1.msra.mxu0 0.0
    %315 = vmatprep.subr.mxu0 0.0
    %316 = vmatpush1.msra.mxu0 0.0
    %317 = vmatprep.subr.mxu0 0.0
    %318 = vmatpush1.msra.mxu0 0.0
    %319 = vmatprep.subr.mxu0 0.0
    %320 = vmatpush1.msra.mxu0 0.0
    %321 = vmatprep.subr.mxu0 0.0
    %322 = vmatpush1.msra.mxu0 0.0
    %323 = vmatprep.mubr.f32.mxu0 0.0
    %324 = vmatmul.mubr.f32.gmra.mrb[0].mxu0 %v257
    %v325 = vpop.f32.mrb[0].mxu0
    %v326 = vadd.f32 %v256, %v325
    %v327 = vpop.f32.mrb[0].mxu0
    %328 = vdwg.mxu0
    %vm329 = vcmask 1040384
    %v330 = vsel %vm329, %v326, -inf
    %331 = vmax.xlane.f32.xlu0 %v330
    %v332 = vpop.xlane.xlu0 %331
    %v333 = vsub.f32 %v326, %v332
    %v334 = vmul.f32 %v333, 1.442695
    %v335 = vpow.pop %v334
    %v336 = vsel %vm329, %v335, 0.0
    %337 = vadd.xlane.f32.xlu0 %v336
    %v338 = vpop.xlane.xlu0 %337
    %v339 = vlog2.pop %v338
    %v340 = vmul.f32 %v339, 0.6931472
    %v341 = vadd.f32 %v340, %v332
    %v342 = vsub.f32 %v326, %v341
    %343 = vst [vmem:[#allocation4] sm:$0x1] %v342
    // Predicated region
    $region38: #{decoder_decode.1} parent=1 // pred_check
      _
    $region39: #{decoder_decode.1} parent=1 // pred_check_branch
      %345 = sbr.rel (0) target = $region41
    $region40: #{decoder_decode.1} parent=1 // pred_region
      %s347 = ssub.s32 16, 16
      %348 = vsyncadd [#allocation5], %s347
      %s350 = sshll.u32 [#allocation4], 4
      %s351 = int_to_ptr.vmem [resolvable:$true] %s350
      %353 = dma.vmem_to_hbm [thread:$0]  %s351, 16, %s9, [#allocation5]
    $region41: #{decoder_decode.1} parent=1 // pred_fallthru
      _
    // Predicated region
    $region42: #{decoder_decode.1} parent=1 // pred_check
      _
    $region43: #{decoder_decode.1} parent=1 // pred_check_branch
      %355 = sbr.rel (0) target = $region45
    $region44: #{decoder_decode.1} parent=1 // pred_region
      %s357 = ssub.s32 16, 16
      %358 = vsyncadd [#allocation7], %s357
      %s360 = sshll.u32 [#allocation6], 4
      %s361 = int_to_ptr.vmem [resolvable:$true] %s360
      %363 = dma.vmem_to_hbm [thread:$0]  %s361, 16, %s10, [#allocation7]
    $region45: #{decoder_decode.1} parent=1 // pred_fallthru
      _
    // Predicated region
    $region46: #{decoder_decode.1} parent=1 // pred_check
      _
    $region47: #{decoder_decode.1} parent=1 // pred_check_branch
      %365 = sbr.rel (0) target = $region49
    $region48: #{decoder_decode.1} parent=1 // pred_region
      %366 = dma.done [#allocation5], 16
    $region49: #{decoder_decode.1} parent=1 // pred_fallthru
      _
    // Predicated region
    $region50: #{decoder_decode.1} parent=1 // pred_check
      _
    $region51: #{decoder_decode.1} parent=1 // pred_check_branch
      %368 = sbr.rel (0) target = $region53
    $region52: #{decoder_decode.1} parent=1 // pred_region
      %369 = dma.done [#allocation7], 16
    $region53: #{decoder_decode.1} parent=1 // pred_fallthru
      _
    %370 = vsyncpa [#allocation5], 1
    %371 = vsyncpa [#allocation7], 1

</llo_original>
